<compile_context>
chip_gen: v7x
topology: tpu7x:2x2x1
jax: 0.10.0
libtpu: 0.0.40
codegen_flags: <defaults>
</compile_context>

<pallas_src>
import functools

import jax
import jax.numpy as jnp
from jax import lax
from jax.experimental import pallas as pl
from jax.experimental.pallas import tpu as pltpu


# ---------------------------------------------------------------------------
# Path A: resident-Q kernel (small embedding tables).
#   Q is held in VMEM for every grid step (constant block index).  The row
#   gather is algebraic:  out[0, j] = scores[0, prompt[j]]  with
#   scores = w_eff . Q^T  (one MXU matmul) and a one-hot matmul gather.
# ---------------------------------------------------------------------------
def _resident_q_kernel(*refs, add_noise):
    if add_noise:
        weff_ref, q_ref, idx_ref, noise_ref, out_ref = refs
    else:
        weff_ref, q_ref, idx_ref, out_ref = refs
        noise_ref = None

    num_prompts = q_ref.shape[0]

    # scores[0, p] = Q[p, :] . w_eff  -- contract last dims (no transpose).
    scores = lax.dot_general(
        weff_ref[...].astype(jnp.float32), q_ref[...].astype(jnp.float32),
        dimension_numbers=(((1,), (1,)), ((), ())),
        preferred_element_type=jnp.float32)                    # (1, num_prompts)

    idx = idx_ref[...]                                         # (1, tb) int32
    tb = idx.shape[1]
    row_ids = lax.broadcasted_iota(jnp.int32, (num_prompts, tb), 0)
    onehot = (row_ids == idx).astype(jnp.float32)              # (num_prompts, tb)

    # out[0, j] = scores[0, idx[j]]   -- lane-dense (1, tb)
    out = jnp.dot(scores, onehot, preferred_element_type=jnp.float32)
    if add_noise:
        out = out + noise_ref[...]
    out_ref[...] = out


# ---------------------------------------------------------------------------
# Path B: HBM gather kernel (large embedding tables).
#   Prompt ids are scalar-prefetched into SMEM and drive per-row DMAs
#   Q[id] -> VMEM.  The gather for grid step i+1 is issued before computing on
#   step i (double buffered) and completion is checked with ONE wait sized for
#   the whole (tb, text_dim) slot (DMA semaphores count bytes, so the sum of
#   the tb row copies equals one full-slot wait).
# ---------------------------------------------------------------------------
def _hbm_gather_kernel(*refs, tb, nb, add_noise):
    if add_noise:
        prompt_ref, weff_ref, noise_ref, q_hbm, out_ref, pe_buf, sem = refs
    else:
        prompt_ref, weff_ref, q_hbm, out_ref, pe_buf, sem = refs
        noise_ref = None

    i = pl.program_id(0)
    slot = (i % 2) if nb > 1 else 0

    def issue_gather(step, slot_):
        base = step * tb

        def body(j, carry):
            pltpu.make_async_copy(q_hbm.at[prompt_ref[base + j]],
                                  pe_buf.at[slot_, j],
                                  sem.at[slot_]).start()
            return carry

        # Unrolled so the LLO scheduler can co-issue SMEM index reads, address
        # math and descriptor pushes.
        lax.fori_loop(0, tb, body, 0, unroll=8)

    # First grid step: nothing in flight yet, issue our own rows.
    @pl.when(i == 0)
    def _():
        issue_gather(0, 0)

    # Prefetch the next step's rows into the other slot; overlaps with this
    # step's wait + GEMV (requires "arbitrary" grid semantics).
    if nb > 1:
        @pl.when(i + 1 < nb)
        def _():
            issue_gather(i + 1, 1 - slot)

    # ONE semaphore wait covering all tb row copies of the current slot.
    pltpu.make_async_copy(pe_buf.at[slot], pe_buf.at[slot], sem.at[slot]).wait()

    pe = pe_buf[slot].astype(jnp.float32)                      # (tb, text_dim)
    # out[0, j] = pe[j, :] . w_eff  -- lane-dense (1, tb) output.
    out = lax.dot_general(
        weff_ref[...].astype(jnp.float32), pe,
        dimension_numbers=(((1,), (1,)), ((), ())),
        preferred_element_type=jnp.float32)
    if add_noise:
        out = out + noise_ref[...]
    out_ref[...] = out


# ---------------------------------------------------------------------------
# Plain-JAX prologue: fold normalize(P), classifier and text_proj into w_eff.
#   w_eff = ((P / max(||P||, 1e-12)) * W_cls) @ W_proj      -> (1, text_dim)
# (A single tiny GEMV; doing it in XLA avoids an extra kernel launch.)
# ---------------------------------------------------------------------------
def _fold_weights(params):
    p = params["P"].astype(jnp.float32)                        # (1, dim)
    inv_norm = lax.rsqrt(jnp.maximum(jnp.sum(p * p, axis=1, keepdims=True),
                                     1e-24))
    v = p * inv_norm * params["classifier"].astype(jnp.float32)
    return v @ params["text_proj"].astype(jnp.float32)         # (1, text_dim)


def _choose_tiling(batch, text_dim, itemsize):
    """Batch tile TB and tile count nb, budgeted against VMEM (v7x-safe)."""
    # Double-buffered gather scratch is 2*TB*text_dim*itemsize bytes; keep it
    # well under the 32 MiB scoped-VMEM default (v7x physical VMEM is 64 MiB).
    budget = 8 * 1024 * 1024
    max_tb = max(128, min(1024, (budget // (2 * text_dim * itemsize)) // 128 * 128))
    if batch <= 128 or (batch < 256 and batch <= max_tb):
        return batch, 1            # single tile; block == full array, no padding
    # >= 2 tiles of 128-aligned size (lane-dense output, >=2 grid steps).
    tb = min(max_tb, max(128, 128 * (batch // 256)))
    return tb, -(-batch // tb)


# ---------------------------------------------------------------------------
# Wrapper: JAX/Pallas equivalent of MFModel_Train.forward(prompt, test, alpha)
# ---------------------------------------------------------------------------
def mf_model_forward(params, prompt, *, key=None, test=False, alpha=0.05,
                     gather_mode="auto"):
    Q_w = params["Q"]                            # (num_prompts, text_dim)
    num_prompts, text_dim = Q_w.shape
    B = int(prompt.shape[0])

    w_eff = _fold_weights(params)                # (1, text_dim) f32

    itemsize = Q_w.dtype.itemsize
    TB, nb = _choose_tiling(B, text_dim, itemsize)
    Bp = nb * TB

    prompt_i32 = prompt.astype(jnp.int32)
    if Bp != B:
        prompt_i32 = jnp.pad(prompt_i32, (0, Bp - B))          # pad with row 0
    prompt_row = prompt_i32.reshape(1, Bp)

    add_noise = (not test) and (key is not None)
    if add_noise:
        # torch: prompt_embed += randn_like(prompt_embed) * alpha  (text_dim space)
        # folded: out += alpha * (z . w_eff), z~N(0,I)  ==  N(0, alpha^2*||w_eff||^2)
        # TODO(synk): output-space noise is distributionally identical, not a
        # bit-exact replay of torch.randn_like's per-element draws.
        sigma = alpha * jnp.sqrt(jnp.sum(w_eff * w_eff))
        noise = sigma * jax.random.normal(key, (1, Bp), jnp.float32)

    # Adaptive gather path: keep Q resident in VMEM when the table is small;
    # otherwise DMA-gather rows from HBM.
    q_bytes = num_prompts * text_dim * itemsize
    if gather_mode == "auto":
        use_resident = (q_bytes <= 4 * 1024 * 1024) and (num_prompts <= 2048)
    else:
        use_resident = (gather_mode == "resident")

    out_shape = jax.ShapeDtypeStruct((1, Bp), jnp.float32)

    if use_resident:
        kernel = functools.partial(_resident_q_kernel, add_noise=add_noise)
        in_specs = [
            pl.BlockSpec((1, text_dim), lambda i: (0, 0)),              # w_eff
            pl.BlockSpec((num_prompts, text_dim), lambda i: (0, 0)),    # Q (resident)
            pl.BlockSpec((1, TB), lambda i: (0, i)),                    # prompt ids
        ]
        inputs = [w_eff, Q_w, prompt_row]
        if add_noise:
            in_specs.append(pl.BlockSpec((1, TB), lambda i: (0, i)))    # noise
            inputs.append(noise)
        out = pl.pallas_call(
            kernel,
            out_shape=out_shape,
            grid=(nb,),
            in_specs=in_specs,
            out_specs=pl.BlockSpec((1, TB), lambda i: (0, i)),
            compiler_params=pltpu.CompilerParams(
                dimension_semantics=("parallel",)),
        )(*inputs)
    else:
        kernel = functools.partial(_hbm_gather_kernel,
                                   tb=TB, nb=nb, add_noise=add_noise)
        in_specs = [pl.BlockSpec((1, text_dim), lambda i, pr: (0, 0))]  # w_eff
        inputs = [w_eff]
        if add_noise:
            in_specs.append(pl.BlockSpec((1, TB), lambda i, pr: (0, i)))
            inputs.append(noise)
        in_specs.append(pl.BlockSpec(memory_space=pl.ANY))              # Q in HBM
        inputs.append(Q_w)
        nbuf = min(nb, 2)
        out = pl.pallas_call(
            kernel,
            out_shape=out_shape,
            grid_spec=pltpu.PrefetchScalarGridSpec(
                num_scalar_prefetch=1,               # prompt ids -> SMEM
                grid=(nb,),
                in_specs=in_specs,
                out_specs=pl.BlockSpec((1, TB), lambda i, pr: (0, i)),
                scratch_shapes=[
                    pltpu.VMEM((nbuf, TB, text_dim), Q_w.dtype),  # gather buffers
                    pltpu.SemaphoreType.DMA((nbuf,)),
                ]),
            # Cross-step gather prefetch makes iterations order-dependent.
            compiler_params=pltpu.CompilerParams(
                dimension_semantics=("arbitrary",)),
        )(prompt_i32, *inputs)

    # matches torch .squeeze(): (B,) for B > 1, scalar for B == 1
    return jnp.squeeze(out[:, :B])


# ---------------------------------------------------------------------------
if __name__ == "__main__":
    # Small deterministic synthetic setup (dim = module default 128).
    num_prompts, text_dim, dim, B = 16, 128, 128, 8

    root = jax.random.PRNGKey(0)
    k_emb, k_p, k_proj, k_cls, k_idx, k_noise = jax.random.split(root, 6)

    embeddings = jax.random.normal(k_emb, (num_prompts, text_dim), jnp.float32)
    params = {
        "P": jax.random.normal(k_p, (1, dim), jnp.float32),
        "Q": embeddings,                       # frozen copy of embeddings
        "text_proj": jax.random.uniform(
            k_proj, (dim, text_dim), jnp.float32,
            minval=-1.0 / text_dim ** 0.5, maxval=1.0 / text_dim ** 0.5),
        "classifier": jax.random.uniform(
            k_cls, (1, dim), jnp.float32,
            minval=-1.0 / dim ** 0.5, maxval=1.0 / dim ** 0.5),
    }
    prompt = jax.random.randint(k_idx, (B,), 0, num_prompts)

    # Pure-JAX reference for the deterministic (test=True) path.
    m = params["P"] / jnp.maximum(
        jnp.linalg.norm(params["P"], axis=1, keepdims=True), 1e-12)
    pe_ref = jnp.take(params["Q"], prompt, axis=0) @ params["text_proj"].T
    ref = jnp.squeeze((m * pe_ref) @ params["classifier"].T)

    # Resident-Q path (auto-selected for this tiny table): test + train.
    out_test_res = jax.block_until_ready(
        mf_model_forward(params, prompt, test=True))
    out_train_res = jax.block_until_ready(
        mf_model_forward(params, prompt, key=k_noise, test=False, alpha=0.05))

    # HBM DMA-gather path (forced, exercises the large-table code path).
    out_test_dma = jax.block_until_ready(
        mf_model_forward(params, prompt, test=True, gather_mode="hbm"))
    out_train_dma = jax.block_until_ready(
        mf_model_forward(params, prompt, key=k_noise, test=False, alpha=0.05,
                         gather_mode="hbm"))

    assert out_test_res.shape == (B,) and out_test_dma.shape == (B,)
    assert out_train_res.shape == (B,) and out_train_dma.shape == (B,)
    assert jnp.allclose(out_test_res, ref, atol=1e-4, rtol=1e-4)
    assert jnp.allclose(out_test_dma, ref, atol=1e-4, rtol=1e-4)
    assert bool(jnp.all(jnp.isfinite(out_train_res)))
    assert bool(jnp.all(jnp.isfinite(out_train_dma)))

    print("KERNEL_OK")
</pallas_src>

<mosaic_0001>
module attributes {stable_mosaic.version = 11 : i64} {
  func.func @_resident_q_kernel(%arg0: i32, %arg1: memref<1x128xf32, #tpu.memory_space<vmem>>, %arg2: memref<16x128xf32, #tpu.memory_space<vmem>>, %arg3: memref<1x8xi32, #tpu.memory_space<vmem>>, %arg4: memref<1x8xf32, #tpu.memory_space<vmem>>) attributes {dimension_semantics = [#tpu.dimension_semantics<parallel>], iteration_bounds = array<i64: 1>, scalar_prefetch = 0 : i64, scratch_operands = 0 : i64, tpu.core_type = #tpu.core_type<tc>, window_params = [{pipeline_mode = #tpu.pipeline_mode<synchronous>, transform_indices = @transform_0, window_bounds = array<i64: 1, 128>}, {pipeline_mode = #tpu.pipeline_mode<synchronous>, transform_indices = @transform_1, window_bounds = array<i64: 16, 128>}, {transform_indices = @transform_2, window_bounds = array<i64: 1, 8>}, {transform_indices = @transform_3, window_bounds = array<i64: 1, 8>}]} {
    %c0 = arith.constant 0 : index
    %c0_0 = arith.constant 0 : index
    %0 = vector.load %arg1[%c0, %c0_0] : memref<1x128xf32, #tpu.memory_space<vmem>>, vector<1x128xf32>
    %c0_1 = arith.constant 0 : index
    %c0_2 = arith.constant 0 : index
    %1 = vector.load %arg2[%c0_1, %c0_2] : memref<16x128xf32, #tpu.memory_space<vmem>>, vector<16x128xf32>
    %cst = arith.constant dense<0.000000e+00> : vector<1x16xf32>
    %2 = tpu.matmul %0, %1, %cst {dimension_numbers = #tpu.dot_dimension_numbers<[1], [1], [0], [0], [0, 0, 1, 0], [], []>} : vector<1x128xf32>, vector<16x128xf32>, vector<1x16xf32> -> vector<1x16xf32>
    %c0_3 = arith.constant 0 : index
    %c0_4 = arith.constant 0 : index
    %3 = vector.load %arg3[%c0_3, %c0_4] : memref<1x8xi32, #tpu.memory_space<vmem>>, vector<1x8xi32>
    %4 = tpu.iota {dimensions = array<i32: 0>} : vector<16x8xi32>
    %5 = vector.broadcast %3 : vector<1x8xi32> to vector<16x8xi32>
    %6 = arith.cmpi eq, %4, %5 : vector<16x8xi32>
    %7 = arith.extui %6 : vector<16x8xi1> to vector<16x8xi32>
    %8 = arith.sitofp %7 : vector<16x8xi32> to vector<16x8xf32>
    %cst_5 = arith.constant dense<0.000000e+00> : vector<1x8xf32>
    %9 = tpu.matmul %2, %8, %cst_5 {dimension_numbers = #tpu.dot_dimension_numbers<[1], [0], [0], [1], [0, 0, 1, 1], [], []>} : vector<1x16xf32>, vector<16x8xf32>, vector<1x8xf32> -> vector<1x8xf32>
    %c0_6 = arith.constant 0 : index
    %c0_7 = arith.constant 0 : index
    %10 = vector.load %arg4[%c0_6, %c0_7] : memref<1x8xf32, #tpu.memory_space<vmem>>, vector<1x8xf32>
    tpu.vector_store %arg4[%c0_6, %c0_7], %9 {strides = array<i32>} : memref<1x8xf32, #tpu.memory_space<vmem>>, vector<1x8xf32>,
    return
  }
  func.func @transform_0(%arg0: i32) -> (i32, i32) {
    %c0_i32 = arith.constant 0 : i32
    %c0_i32_0 = arith.constant 0 : i32
    %c0_i32_1 = arith.constant 0 : i32
    return %c0_i32, %c0_i32_0 : i32, i32
  }
  func.func @transform_1(%arg0: i32) -> (i32, i32) {
    %c0_i32 = arith.constant 0 : i32
    %c0_i32_0 = arith.constant 0 : i32
    %c0_i32_1 = arith.constant 0 : i32
    return %c0_i32, %c0_i32_0 : i32, i32
  }
  func.func @transform_2(%arg0: i32) -> (i32, i32) {
    %c0_i32 = arith.constant 0 : i32
    %c0_i32_0 = arith.constant 0 : i32
    return %c0_i32, %arg0 : i32, i32
  }
  func.func @transform_3(%arg0: i32) -> (i32, i32) {
    %c0_i32 = arith.constant 0 : i32
    %c0_i32_0 = arith.constant 0 : i32
    return %c0_i32, %arg0 : i32, i32
  }
}

</mosaic_0001>

<llo_original>
// kernel: tpu_custom_call.1
$region0: #{tpu_custom_call.1}
  #allocation0 [shape = 'u32[]', space=smem, size = 0x4, offset = 0x4, fixed_abs, tag = 'smem constant byte address 0x4 - core index']
  #allocation1 [shape = 'u32[144,128]{1,0:T(1,128)}', space=vmem, size = 0x12000, scoped, tag = 'internal scratch']
  %s0 = inlined_call_operand.hbm [shape: f32[1,128], index: 0, kind: input, shape index: {}]
  %s1 = inlined_call_operand.hbm [shape: f32[16,128], index: 1, kind: input, shape index: {}]
  %s2 = inlined_call_operand.vmem [shape: s32[1,8], index: 2, kind: input, shape index: {}]
  %s3 = inlined_call_operand.hbm [shape: f32[1,8], index: 3, kind: output, shape index: {}]
  %s4 = sld [smem:[#allocation0]]
  $region30: #{tpu_custom_call.1} parent=0
    _
  %s6 = ssub.s32 1, %s4
  %s7 = scalar_select 0, %s6, %s4
  $region1: #{tpu_custom_call.1} parent=0
    #allocation2 [shape = 'u8[512]{0}', space=vmem, size = 0x400, scoped, tag = 'input window, operand 0, single buffered']
    #allocation3 [shape = 's32[1]{0}', space=sflag, size = 0x4, scoped, tag = 'scoped memory for tpu_custom_call.1']
    #allocation4 [shape = 's32[1]{0}', space=sflag, size = 0x4, scoped, tag = 'scoped memory for tpu_custom_call.1']
    #allocation5 [shape = 'u8[8192]{0}', space=vmem, size = 0x2000, scoped, tag = 'input window, operand 1, single buffered']
    #allocation6 [shape = 's32[1]{0}', space=sflag, size = 0x4, scoped, tag = 'scoped memory for tpu_custom_call.1']
    #allocation7 [shape = 'u8[512]{0}', space=vmem, size = 0x400, scoped, tag = 'output window, operand 0, single buffered']
    %8 = vsyncpa [#allocation3], 0
    %9 = vsyncpa [#allocation6], 0
    %10 = vsyncpa [#allocation4], 0
    // Predicated region
    $region2: #{tpu_custom_call.1} parent=1 // pred_check
      _
    $region3: #{tpu_custom_call.1} parent=1 // pred_check_branch
      %12 = sbr.rel (0) target = $region5
    $region4: #{tpu_custom_call.1} parent=1 // pred_region
      %s14 = ssub.s32 16, 16
      %15 = vsyncadd [#allocation3], %s14
      %s17 = sshll.u32 [#allocation2], 4
      %s18 = int_to_ptr.vmem [resolvable:$true] %s17
      %20 = dma.hbm_to_vmem [thread:$0]  %s0, 16, %s18, [#allocation3]
    $region5: #{tpu_custom_call.1} parent=1 // pred_fallthru
      _
    // Predicated region
    $region6: #{tpu_custom_call.1} parent=1 // pred_check
      _
    $region7: #{tpu_custom_call.1} parent=1 // pred_check_branch
      %22 = sbr.rel (0) target = $region9
    $region8: #{tpu_custom_call.1} parent=1 // pred_region
      %s24 = ssub.s32 256, 256
      %25 = vsyncadd [#allocation6], %s24
      %s26 = sshll.u32 [#allocation5], 4
      %s27 = int_to_ptr.vmem [resolvable:$true] %s26
      %32 = dma.hbm_to_vmem [thread:$0]  %s1, 256, %s27, [#allocation6], 128, 128, 8
    $region9: #{tpu_custom_call.1} parent=1 // pred_fallthru
      _
    // Predicated region
    $region10: #{tpu_custom_call.1} parent=1 // pred_check
      _
    $region11: #{tpu_custom_call.1} parent=1 // pred_check_branch
      %34 = sbr.rel (0) target = $region13
    $region12: #{tpu_custom_call.1} parent=1 // pred_region
      _
    $region13: #{tpu_custom_call.1} parent=1 // pred_fallthru
      _
    // Predicated region
    $region14: #{tpu_custom_call.1} parent=1 // pred_check
      _
    $region15: #{tpu_custom_call.1} parent=1 // pred_check_branch
      %36 = sbr.rel (0) target = $region17
    $region16: #{tpu_custom_call.1} parent=1 // pred_region
      %37 = dma.done [#allocation3], 16
    $region17: #{tpu_custom_call.1} parent=1 // pred_fallthru
      _
    // Predicated region
    $region18: #{tpu_custom_call.1} parent=1 // pred_check
      _
    $region19: #{tpu_custom_call.1} parent=1 // pred_check_branch
      %39 = sbr.rel (0) target = $region21
    $region20: #{tpu_custom_call.1} parent=1 // pred_region
      %40 = dma.done [#allocation6], 256
    $region21: #{tpu_custom_call.1} parent=1 // pred_fallthru
      _
    %v41 = vld [vmem:[#allocation2] sm:$0x1]
    %v42 = vld [vmem:[#allocation5] sm:$0xff]
    %v43 = vld [vmem:[#allocation5 + $0x8] sm:$0xff]
    %44 = vmatprep.subr.mxu0 0.0
    %45 = vmatpush1.xpose.msra.mxu0 %v42
    %46 = vmatprep.subr.mxu0 0.0
    %47 = vmatpush1.xpose.msra.mxu0 %v43
    %48 = vmatprep.subr.mxu0 0.0
    %49 = vmatpush1.xpose.msra.mxu0 0.0
    %50 = vmatprep.subr.mxu0 0.0
    %51 = vmatpush1.xpose.msra.mxu0 0.0
    %52 = vmatprep.subr.mxu0 0.0
    %53 = vmatpush1.xpose.msra.mxu0 0.0
    %54 = vmatprep.subr.mxu0 0.0
    %55 = vmatpush1.xpose.msra.mxu0 0.0
    %56 = vmatprep.subr.mxu0 0.0
    %57 = vmatpush1.xpose.msra.mxu0 0.0
    %58 = vmatprep.subr.mxu0 0.0
    %59 = vmatpush1.xpose.msra.mxu0 0.0
    %60 = vmatprep.subr.mxu0 0.0
    %61 = vmatpush1.xpose.msra.mxu0 0.0
    %62 = vmatprep.subr.mxu0 0.0
    %63 = vmatpush1.xpose.msra.mxu0 0.0
    %64 = vmatprep.subr.mxu0 0.0
    %65 = vmatpush1.xpose.msra.mxu0 0.0
    %66 = vmatprep.subr.mxu0 0.0
    %67 = vmatpush1.xpose.msra.mxu0 0.0
    %68 = vmatprep.subr.mxu0 0.0
    %69 = vmatpush1.xpose.msra.mxu0 0.0
    %70 = vmatprep.subr.mxu0 0.0
    %71 = vmatpush1.xpose.msra.mxu0 0.0
    %72 = vmatprep.subr.mxu0 0.0
    %73 = vmatpush1.xpose.msra.mxu0 0.0
    %74 = vmatprep.subr.mxu0 0.0
    %75 = vmatpush1.xpose.msra.mxu0 0.0
    %76 = vmatprep.subr.mxu0 0.0
    %77 = vmatpush1.xpose.msra.mxu0 0.0
    %78 = vmatprep.subr.mxu0 0.0
    %79 = vmatpush1.xpose.msra.mxu0 0.0
    %80 = vmatprep.subr.mxu0 0.0
    %81 = vmatpush1.xpose.msra.mxu0 0.0
    %82 = vmatprep.subr.mxu0 0.0
    %83 = vmatpush1.xpose.msra.mxu0 0.0
    %84 = vmatprep.subr.mxu0 0.0
    %85 = vmatpush1.xpose.msra.mxu0 0.0
    %86 = vmatprep.subr.mxu0 0.0
    %87 = vmatpush1.xpose.msra.mxu0 0.0
    %88 = vmatprep.subr.mxu0 0.0
    %89 = vmatpush1.xpose.msra.mxu0 0.0
    %90 = vmatprep.subr.mxu0 0.0
    %91 = vmatpush1.xpose.msra.mxu0 0.0
    %92 = vmatprep.subr.mxu0 0.0
    %93 = vmatpush1.xpose.msra.mxu0 0.0
    %94 = vmatprep.subr.mxu0 0.0
    %95 = vmatpush1.xpose.msra.mxu0 0.0
    %96 = vmatprep.subr.mxu0 0.0
    %97 = vmatpush1.xpose.msra.mxu0 0.0
    %98 = vmatprep.subr.mxu0 0.0
    %99 = vmatpush1.xpose.msra.mxu0 0.0
    %100 = vmatprep.subr.mxu0 0.0
    %101 = vmatpush1.xpose.msra.mxu0 0.0
    %102 = vmatprep.subr.mxu0 0.0
    %103 = vmatpush1.xpose.msra.mxu0 0.0
    %104 = vmatprep.subr.mxu0 0.0
    %105 = vmatpush1.xpose.msra.mxu0 0.0
    %106 = vmatprep.subr.mxu0 0.0
    %107 = vmatpush1.xpose.msra.mxu0 0.0
    %108 = vmatprep.mubr.f32.mxu0 0.0
    %109 = vmatmul.mubr.f32.gmra.mrb[0].mxu0 %v41
    %v110 = vpop.f32.mrb[0].mxu0
    %v111 = vadd.f32 0.0, %v110
    %v112 = vpop.f32.mrb[0].mxu0
    %113 = vdwg.mxu0
    %v114 = vld [vmem:[%s2] sm:$0x1]
    %v115 = vlaneseq
    %v116 = vshrl.u32 %v115, 7
    %v117 = vadd.s32 %v116, 8
    %v118 = vlaneseq
    %v119 = vshrl.u32 %v118, 7
    %v120 = vsub.s32 0, %v119
    %v121 = vrot.slane %v114, %v120
    %vm122 = vcmp.eq.s32.totalorder %v116, %v121
    %vm123 = vcmp.eq.s32.totalorder %v117, %v121
    %v124 = vsel %vm122, 1, 0
    %v125 = vsel %vm123, 1, 0
    %v126 = vcvt.s32.f32 %v124
    %v127 = vcvt.s32.f32 %v125
    %vm128 = vcmask 130048
    %v130 = vsel %vm128, %v111, 0
    %132 = vmatprep.subr.mxu0 0.0
    %133 = vmatpush1.msra.mxu0 %v126
    %134 = vmatprep.subr.mxu0 0.0
    %135 = vmatpush1.msra.mxu0 %v127
    %136 = vmatprep.subr.mxu0 0.0
    %137 = vmatpush1.msra.mxu0 0.0
    %138 = vmatprep.subr.mxu0 0.0
    %139 = vmatpush1.msra.mxu0 0.0
    %140 = vmatprep.subr.mxu0 0.0
    %141 = vmatpush1.msra.mxu0 0.0
    %142 = vmatprep.subr.mxu0 0.0
    %143 = vmatpush1.msra.mxu0 0.0
    %144 = vmatprep.subr.mxu0 0.0
    %145 = vmatpush1.msra.mxu0 0.0
    %146 = vmatprep.subr.mxu0 0.0
    %147 = vmatpush1.msra.mxu0 0.0
    %148 = vmatprep.subr.mxu0 0.0
    %149 = vmatpush1.msra.mxu0 0.0
    %150 = vmatprep.subr.mxu0 0.0
    %151 = vmatpush1.msra.mxu0 0.0
    %152 = vmatprep.subr.mxu0 0.0
    %153 = vmatpush1.msra.mxu0 0.0
    %154 = vmatprep.subr.mxu0 0.0
    %155 = vmatpush1.msra.mxu0 0.0
    %156 = vmatprep.subr.mxu0 0.0
    %157 = vmatpush1.msra.mxu0 0.0
    %158 = vmatprep.subr.mxu0 0.0
    %159 = vmatpush1.msra.mxu0 0.0
    %160 = vmatprep.subr.mxu0 0.0
    %161 = vmatpush1.msra.mxu0 0.0
    %162 = vmatprep.subr.mxu0 0.0
    %163 = vmatpush1.msra.mxu0 0.0
    %164 = vmatprep.subr.mxu0 0.0
    %165 = vmatpush1.msra.mxu0 0.0
    %166 = vmatprep.subr.mxu0 0.0
    %167 = vmatpush1.msra.mxu0 0.0
    %168 = vmatprep.subr.mxu0 0.0
    %169 = vmatpush1.msra.mxu0 0.0
    %170 = vmatprep.subr.mxu0 0.0
    %171 = vmatpush1.msra.mxu0 0.0
    %172 = vmatprep.subr.mxu0 0.0
    %173 = vmatpush1.msra.mxu0 0.0
    %174 = vmatprep.subr.mxu0 0.0
    %175 = vmatpush1.msra.mxu0 0.0
    %176 = vmatprep.subr.mxu0 0.0
    %177 = vmatpush1.msra.mxu0 0.0
    %178 = vmatprep.subr.mxu0 0.0
    %179 = vmatpush1.msra.mxu0 0.0
    %180 = vmatprep.subr.mxu0 0.0
    %181 = vmatpush1.msra.mxu0 0.0
    %182 = vmatprep.subr.mxu0 0.0
    %183 = vmatpush1.msra.mxu0 0.0
    %184 = vmatprep.subr.mxu0 0.0
    %185 = vmatpush1.msra.mxu0 0.0
    %186 = vmatprep.subr.mxu0 0.0
    %187 = vmatpush1.msra.mxu0 0.0
    %188 = vmatprep.subr.mxu0 0.0
    %189 = vmatpush1.msra.mxu0 0.0
    %190 = vmatprep.subr.mxu0 0.0
    %191 = vmatpush1.msra.mxu0 0.0
    %192 = vmatprep.subr.mxu0 0.0
    %193 = vmatpush1.msra.mxu0 0.0
    %194 = vmatprep.subr.mxu0 0.0
    %195 = vmatpush1.msra.mxu0 0.0
    %196 = vmatprep.mubr.f32.mxu0 0.0
    %197 = vmatmul.mubr.f32.gmra.mrb[0].mxu0 %v130
    %v198 = vpop.f32.mrb[0].mxu0
    %v199 = vadd.f32 0.0, %v198
    %v200 = vpop.f32.mrb[0].mxu0
    %201 = vdwg.mxu0
    %vm202 = vcmask 57344
    %203 = vst.msk [vmem:[#allocation7] sm:$0x1] %vm202, %v199
    // Predicated region
    $region22: #{tpu_custom_call.1} parent=1 // pred_check
      _
    $region23: #{tpu_custom_call.1} parent=1 // pred_check_branch
      %205 = sbr.rel (0) target = $region25
    $region24: #{tpu_custom_call.1} parent=1 // pred_region
      %s207 = ssub.s32 16, 16
      %208 = vsyncadd [#allocation4], %s207
      %s210 = sshll.u32 [#allocation7], 4
      %s211 = int_to_ptr.vmem [resolvable:$true] %s210
      %213 = dma.vmem_to_hbm [thread:$0]  %s211, 16, %s3, [#allocation4]
    $region25: #{tpu_custom_call.1} parent=1 // pred_fallthru
      _
    // Predicated region
    $region26: #{tpu_custom_call.1} parent=1 // pred_check
      _
    $region27: #{tpu_custom_call.1} parent=1 // pred_check_branch
      %215 = sbr.rel (0) target = $region29
    $region28: #{tpu_custom_call.1} parent=1 // pred_region
      %216 = dma.done [#allocation4], 16
    $region29: #{tpu_custom_call.1} parent=1 // pred_fallthru
      _
    %217 = vsyncpa [#allocation3], 1
    %218 = vsyncpa [#allocation6], 1
    %219 = vsyncpa [#allocation4], 1

</llo_original>
